<compile_context>
chip_gen: v6e
topology: v6e:2x2x1
jax: 0.10.0
libtpu: 0.0.40
codegen_flags: <defaults>
</compile_context>

<pallas_src>
import jax
import jax.numpy as jnp
from jax.experimental import pallas as pl
from jax.experimental.pallas import tpu as pltpu


def separable_conv2d(x_nchw, dw_weight, pw_weight, padding,
                     compute_dtype=jnp.float32):
    """Fused depthwise-separable conv, NCHW in / NCHW out.

    x_nchw:    (N, C_in, H, W)
    dw_weight: (C_in, 1, KH, KW)    (PyTorch depthwise layout, groups=C_in)
    pw_weight: (C_out, C_in, 1, 1)  (PyTorch 1x1 conv layout)
    padding:   (ph, pw) as in nn.Conv2d
    """
    N, C_in, H, W = map(int, x_nchw.shape)
    KH, KW = int(dw_weight.shape[2]), int(dw_weight.shape[3])
    C_out = int(pw_weight.shape[0])
    ph, pw_ = int(padding[0]), int(padding[1])
    Hp, Wp = H + 2 * ph, W + 2 * pw_
    Ho, Wo = Hp - KH + 1, Wp - KW + 1
    S = Ho * Wo                      # flattened output spatial (lane axis)
    K = C_in * KH * KW               # im2col contraction length

    # --- weight-only glue (K*C_out floats): fuse depthwise x pointwise ---
    # wc[co, (kh*KW + kw)*C_in + ci] = dw[ci, kh, kw] * pw[co, ci]
    dw = dw_weight[:, 0, :, :]                           # (C_in, KH, KW)
    pwm = pw_weight[:, :, 0, 0]                          # (C_out, C_in)
    wc = (jnp.einsum("ckl,oc->oklc", dw, pwm)
          .reshape(C_out, K).astype(compute_dtype))      # (C_out, K)

    def kernel(x_ref, wc_ref, o_ref, xp_ref, rhs_ref):
        # --- padding: zero only the halo border, single interior store ---
        # x_ref block is (1, C_in, H, W); x_ref[0] is already channel-major.
        if ph > 0:
            xp_ref[:, :ph, :] = jnp.zeros((C_in, ph, Wp), xp_ref.dtype)
            xp_ref[:, ph + H:, :] = jnp.zeros((C_in, ph, Wp), xp_ref.dtype)
        if pw_ > 0:
            xp_ref[:, :, :pw_] = jnp.zeros((C_in, Hp, pw_), xp_ref.dtype)
            xp_ref[:, :, pw_ + W:] = jnp.zeros((C_in, Hp, pw_), xp_ref.dtype)
        xp_ref[:, ph:ph + H, pw_:pw_ + W] = x_ref[0].astype(xp_ref.dtype)

        # --- im2col: build the lane-dense RHS (K, S) ONCE per grid step ---
        for kh in range(KH):                             # static unroll (KH*KW small)
            for kw in range(KW):
                t = kh * KW + kw
                slab = xp_ref[:, kh:kh + Ho, kw:kw + Wo]         # (C_in, Ho, Wo)
                rhs_ref[t * C_in:(t + 1) * C_in, :] = slab.reshape(C_in, S)

        # --- single MXU contraction, stored straight to the output block ---
        o_ref[0] = jnp.dot(wc_ref[...], rhs_ref[...],
                           preferred_element_type=jnp.float32).astype(o_ref.dtype)

    out_flat = pl.pallas_call(
        kernel,
        out_shape=jax.ShapeDtypeStruct((N, C_out, S), x_nchw.dtype),
        grid=(N,),                                       # one batch element per step
        in_specs=[
            pl.BlockSpec((1, C_in, H, W), lambda n: (n, 0, 0, 0)),
            pl.BlockSpec((C_out, K), lambda n: (0, 0)),
        ],
        out_specs=pl.BlockSpec((1, C_out, S), lambda n: (n, 0, 0)),
        scratch_shapes=[
            pltpu.VMEM((C_in, Hp, Wp), compute_dtype),   # padded input slab
            pltpu.VMEM((K, S), compute_dtype),           # im2col RHS (lane-dense)
        ],
        compiler_params=pltpu.CompilerParams(
            dimension_semantics=("parallel",)),
    )(x_nchw, wc)

    # Row-major reshape only (no transpose, no copy): (N, C_out, Ho*Wo) -> NCHW.
    return out_flat.reshape(N, C_out, Ho, Wo)


def _reference(x_nchw, dw_weight, pw_weight, padding):
    """Pure-JAX reference matching PyTorch Conv2d semantics."""
    C_in = x_nchw.shape[1]
    ph, pw_ = padding
    y = jax.lax.conv_general_dilated(
        x_nchw, dw_weight, window_strides=(1, 1),
        padding=[(ph, ph), (pw_, pw_)],
        feature_group_count=C_in,
        dimension_numbers=("NCHW", "OIHW", "NCHW"),
    )
    y = jax.lax.conv_general_dilated(
        y, pw_weight, window_strides=(1, 1), padding=[(0, 0), (0, 0)],
        dimension_numbers=("NCHW", "OIHW", "NCHW"),
    )
    return y


if __name__ == "__main__":
    # Small EEGNet-like config: depthwise temporal kernel over the last axis.
    N, C_IN, C_OUT = 2, 4, 8
    H, W = 8, 16
    KERNEL_SIZE = (1, 7)
    PADDING = (0, 3)

    key = jax.random.PRNGKey(0)
    k_x, k_dw, k_pw = jax.random.split(key, 3)

    x = jax.random.normal(k_x, (N, C_IN, H, W), dtype=jnp.float32)
    # Deterministic synthetic parameters (shapes per nn.Conv2d in __init__).
    dw_weight = 0.1 * jax.random.normal(
        k_dw, (C_IN, 1, KERNEL_SIZE[0], KERNEL_SIZE[1]), dtype=jnp.float32)
    pw_weight = 0.1 * jax.random.normal(
        k_pw, (C_OUT, C_IN, 1, 1), dtype=jnp.float32)

    out = separable_conv2d(x, dw_weight, pw_weight, PADDING)
    out = jax.block_until_ready(out)

    ref = _reference(x, dw_weight, pw_weight, PADDING)
    assert out.shape == ref.shape, (out.shape, ref.shape)
    assert jnp.allclose(out, ref, rtol=1e-5, atol=1e-5), float(jnp.max(jnp.abs(out - ref)))

    print("KERNEL_OK")
</pallas_src>

<mosaic_0001>
module attributes {stable_mosaic.version = 11 : i64} {
  func.func @kernel(%arg0: i32, %arg1: memref<1x4x8x16xf32, #tpu.memory_space<vmem>>, %arg2: memref<8x28xf32, #tpu.memory_space<vmem>>, %arg3: memref<1x8x128xf32, #tpu.memory_space<vmem>>, %arg4: memref<4x8x22xf32, #tpu.memory_space<vmem>>, %arg5: memref<28x128xf32, #tpu.memory_space<vmem>>) attributes {dimension_semantics = [#tpu.dimension_semantics<parallel>], iteration_bounds = array<i64: 2>, scalar_prefetch = 0 : i64, scratch_operands = 2 : i64, tpu.core_type = #tpu.core_type<tc>, window_params = [{transform_indices = @transform_0, window_bounds = array<i64: 1, 4, 8, 16>}, {pipeline_mode = #tpu.pipeline_mode<synchronous>, transform_indices = @transform_1, window_bounds = array<i64: 8, 28>}, {transform_indices = @transform_2, window_bounds = array<i64: 1, 8, 128>}]} {
    %cst = arith.constant 0.000000e+00 : f32
    %0 = vector.broadcast %cst : f32 to vector<4x8x3xf32>
    %c0 = arith.constant 0 : index
    %c0_0 = arith.constant 0 : index
    %c0_1 = arith.constant 0 : index
    %1 = vector.load %arg4[%c0, %c0_0, %c0_1] : memref<4x8x22xf32, #tpu.memory_space<vmem>>, vector<4x8x3xf32>
    tpu.vector_store %arg4[%c0, %c0_0, %c0_1], %0 {strides = array<i32>} : memref<4x8x22xf32, #tpu.memory_space<vmem>>, vector<4x8x3xf32>,
    %cst_2 = arith.constant 0.000000e+00 : f32
    %2 = vector.broadcast %cst_2 : f32 to vector<4x8x3xf32>
    %c0_3 = arith.constant 0 : index
    %c0_4 = arith.constant 0 : index
    %c19 = arith.constant 19 : index
    %3 = vector.load %arg4[%c0_3, %c0_4, %c19] : memref<4x8x22xf32, #tpu.memory_space<vmem>>, vector<4x8x3xf32>
    tpu.vector_store %arg4[%c0_3, %c0_4, %c19], %2 {strides = array<i32>} : memref<4x8x22xf32, #tpu.memory_space<vmem>>, vector<4x8x3xf32>,
    %c0_5 = arith.constant 0 : index
    %c0_6 = arith.constant 0 : index
    %c0_7 = arith.constant 0 : index
    %c0_8 = arith.constant 0 : index
    %4 = vector.load %arg1[%c0_5, %c0_6, %c0_7, %c0_8] : memref<1x4x8x16xf32, #tpu.memory_space<vmem>>, vector<1x4x8x16xf32>
    %5 = vector.shape_cast %4 : vector<1x4x8x16xf32> to vector<4x8x16xf32>
    %c0_9 = arith.constant 0 : index
    %c0_10 = arith.constant 0 : index
    %c3 = arith.constant 3 : index
    %6 = vector.load %arg4[%c0_9, %c0_10, %c3] : memref<4x8x22xf32, #tpu.memory_space<vmem>>, vector<4x8x16xf32>
    tpu.vector_store %arg4[%c0_9, %c0_10, %c3], %5 {strides = array<i32>} : memref<4x8x22xf32, #tpu.memory_space<vmem>>, vector<4x8x16xf32>,
    %c0_11 = arith.constant 0 : index
    %c0_12 = arith.constant 0 : index
    %c0_13 = arith.constant 0 : index
    %7 = vector.load %arg4[%c0_11, %c0_12, %c0_13] : memref<4x8x22xf32, #tpu.memory_space<vmem>>, vector<4x8x16xf32>
    %8 = vector.shape_cast %7 : vector<4x8x16xf32> to vector<4x128xf32>
    %c0_14 = arith.constant 0 : index
    %c0_15 = arith.constant 0 : index
    %9 = vector.load %arg5[%c0_14, %c0_15] : memref<28x128xf32, #tpu.memory_space<vmem>>, vector<4x128xf32>
    tpu.vector_store %arg5[%c0_14, %c0_15], %8 {strides = array<i32>} : memref<28x128xf32, #tpu.memory_space<vmem>>, vector<4x128xf32>,
    %c0_16 = arith.constant 0 : index
    %c0_17 = arith.constant 0 : index
    %c1 = arith.constant 1 : index
    %10 = vector.load %arg4[%c0_16, %c0_17, %c1] : memref<4x8x22xf32, #tpu.memory_space<vmem>>, vector<4x8x16xf32>
    %11 = vector.shape_cast %10 : vector<4x8x16xf32> to vector<4x128xf32>
    %c4 = arith.constant 4 : index
    %c0_18 = arith.constant 0 : index
    %12 = vector.load %arg5[%c4, %c0_18] : memref<28x128xf32, #tpu.memory_space<vmem>>, vector<4x128xf32>
    tpu.vector_store %arg5[%c4, %c0_18], %11 {strides = array<i32>} : memref<28x128xf32, #tpu.memory_space<vmem>>, vector<4x128xf32>,
    %c0_19 = arith.constant 0 : index
    %c0_20 = arith.constant 0 : index
    %c2 = arith.constant 2 : index
    %13 = vector.load %arg4[%c0_19, %c0_20, %c2] : memref<4x8x22xf32, #tpu.memory_space<vmem>>, vector<4x8x16xf32>
    %14 = vector.shape_cast %13 : vector<4x8x16xf32> to vector<4x128xf32>
    %c8 = arith.constant 8 : index
    %c0_21 = arith.constant 0 : index
    %15 = vector.load %arg5[%c8, %c0_21] : memref<28x128xf32, #tpu.memory_space<vmem>>, vector<4x128xf32>
    tpu.vector_store %arg5[%c8, %c0_21], %14 {strides = array<i32>} : memref<28x128xf32, #tpu.memory_space<vmem>>, vector<4x128xf32>,
    %c0_22 = arith.constant 0 : index
    %c0_23 = arith.constant 0 : index
    %c3_24 = arith.constant 3 : index
    %16 = vector.load %arg4[%c0_22, %c0_23, %c3_24] : memref<4x8x22xf32, #tpu.memory_space<vmem>>, vector<4x8x16xf32>
    %17 = vector.shape_cast %16 : vector<4x8x16xf32> to vector<4x128xf32>
    %c12 = arith.constant 12 : index
    %c0_25 = arith.constant 0 : index
    %18 = vector.load %arg5[%c12, %c0_25] : memref<28x128xf32, #tpu.memory_space<vmem>>, vector<4x128xf32>
    tpu.vector_store %arg5[%c12, %c0_25], %17 {strides = array<i32>} : memref<28x128xf32, #tpu.memory_space<vmem>>, vector<4x128xf32>,
    %c0_26 = arith.constant 0 : index
    %c0_27 = arith.constant 0 : index
    %c4_28 = arith.constant 4 : index
    %19 = vector.load %arg4[%c0_26, %c0_27, %c4_28] : memref<4x8x22xf32, #tpu.memory_space<vmem>>, vector<4x8x16xf32>
    %20 = vector.shape_cast %19 : vector<4x8x16xf32> to vector<4x128xf32>
    %c16 = arith.constant 16 : index
    %c0_29 = arith.constant 0 : index
    %21 = vector.load %arg5[%c16, %c0_29] : memref<28x128xf32, #tpu.memory_space<vmem>>, vector<4x128xf32>
    tpu.vector_store %arg5[%c16, %c0_29], %20 {strides = array<i32>} : memref<28x128xf32, #tpu.memory_space<vmem>>, vector<4x128xf32>,
    %c0_30 = arith.constant 0 : index
    %c0_31 = arith.constant 0 : index
    %c5 = arith.constant 5 : index
    %22 = vector.load %arg4[%c0_30, %c0_31, %c5] : memref<4x8x22xf32, #tpu.memory_space<vmem>>, vector<4x8x16xf32>
    %23 = vector.shape_cast %22 : vector<4x8x16xf32> to vector<4x128xf32>
    %c20 = arith.constant 20 : index
    %c0_32 = arith.constant 0 : index
    %24 = vector.load %arg5[%c20, %c0_32] : memref<28x128xf32, #tpu.memory_space<vmem>>, vector<4x128xf32>
    tpu.vector_store %arg5[%c20, %c0_32], %23 {strides = array<i32>} : memref<28x128xf32, #tpu.memory_space<vmem>>, vector<4x128xf32>,
    %c0_33 = arith.constant 0 : index
    %c0_34 = arith.constant 0 : index
    %c6 = arith.constant 6 : index
    %25 = vector.load %arg4[%c0_33, %c0_34, %c6] : memref<4x8x22xf32, #tpu.memory_space<vmem>>, vector<4x8x16xf32>
    %26 = vector.shape_cast %25 : vector<4x8x16xf32> to vector<4x128xf32>
    %c24 = arith.constant 24 : index
    %c0_35 = arith.constant 0 : index
    %27 = vector.load %arg5[%c24, %c0_35] : memref<28x128xf32, #tpu.memory_space<vmem>>, vector<4x128xf32>
    tpu.vector_store %arg5[%c24, %c0_35], %26 {strides = array<i32>} : memref<28x128xf32, #tpu.memory_space<vmem>>, vector<4x128xf32>,
    %c0_36 = arith.constant 0 : index
    %c0_37 = arith.constant 0 : index
    %28 = vector.load %arg2[%c0_36, %c0_37] : memref<8x28xf32, #tpu.memory_space<vmem>>, vector<8x28xf32>
    %c0_38 = arith.constant 0 : index
    %c0_39 = arith.constant 0 : index
    %29 = vector.load %arg5[%c0_38, %c0_39] : memref<28x128xf32, #tpu.memory_space<vmem>>, vector<28x128xf32>
    %cst_40 = arith.constant dense<0.000000e+00> : vector<8x128xf32>
    %30 = tpu.matmul %28, %29, %cst_40 {dimension_numbers = #tpu.dot_dimension_numbers<[1], [0], [0], [1], [0, 0, 1, 1], [], []>} : vector<8x28xf32>, vector<28x128xf32>, vector<8x128xf32> -> vector<8x128xf32>
    %c0_41 = arith.constant 0 : index
    %c0_42 = arith.constant 0 : index
    %c0_43 = arith.constant 0 : index
    %31 = vector.load %arg3[%c0_41, %c0_42, %c0_43] : memref<1x8x128xf32, #tpu.memory_space<vmem>>, vector<1x8x128xf32>
    %32 = vector.shape_cast %31 : vector<1x8x128xf32> to vector<8x128xf32>
    %33 = vector.shape_cast %30 : vector<8x128xf32> to vector<1x8x128xf32>
    tpu.vector_store %arg3[%c0_41, %c0_42, %c0_43], %33 {strides = array<i32>} : memref<1x8x128xf32, #tpu.memory_space<vmem>>, vector<1x8x128xf32>,
    return
  }
  func.func @transform_0(%arg0: i32) -> (i32, i32, i32, i32) {
    %c0_i32 = arith.constant 0 : i32
    %c0_i32_0 = arith.constant 0 : i32
    %c0_i32_1 = arith.constant 0 : i32
    %c0_i32_2 = arith.constant 0 : i32
    return %arg0, %c0_i32, %c0_i32_0, %c0_i32_1 : i32, i32, i32, i32
  }
  func.func @transform_1(%arg0: i32) -> (i32, i32) {
    %c0_i32 = arith.constant 0 : i32
    %c0_i32_0 = arith.constant 0 : i32
    %c0_i32_1 = arith.constant 0 : i32
    return %c0_i32, %c0_i32_0 : i32, i32
  }
  func.func @transform_2(%arg0: i32) -> (i32, i32, i32) {
    %c0_i32 = arith.constant 0 : i32
    %c0_i32_0 = arith.constant 0 : i32
    %c0_i32_1 = arith.constant 0 : i32
    return %arg0, %c0_i32, %c0_i32_0 : i32, i32, i32
  }
}

</mosaic_0001>

<llo_original>
// kernel: tpu_custom_call.1
$region0: #{tpu_custom_call.1}
  #allocation0 [shape = 'u32[]', space=smem, size = 0x4, offset = 0x4, fixed_abs, tag = 'smem constant byte address 0x4 - core index']
  #allocation1 [shape = 'u32[144,128]{1,0:T(1,128)}', space=vmem, size = 0x12000, scoped, tag = 'internal scratch']
  #allocation2 [shape = 'f32[4,8,22]{2,1,0:T(8,128)}', space=vmem, size = 0x4000, scoped, tag = 'scratch operand']
  #allocation3 [shape = 'f32[28,128]{1,0:T(8,128)}', space=vmem, size = 0x4000, scoped, tag = 'scratch operand']
  %s0 = inlined_call_operand.hbm [shape: f32[2,4,8,16], index: 0, kind: input, shape index: {}]
  %s1 = inlined_call_operand.hbm [shape: f32[8,28], index: 1, kind: input, shape index: {}]
  %s2 = inlined_call_operand.hbm [shape: f32[2,8,128], index: 2, kind: output, shape index: {}]
  %s3 = sld [smem:[#allocation0]]
  $region49: #{tpu_custom_call.1} parent=0
    _
  %s5 = ssub.s32 1, %s3
  %s6 = scalar_select 0, %s5, %s3
  $region1: #{tpu_custom_call.1} parent=0
    #allocation4 [shape = 'u8[32768]{0}', space=vmem, size = 0x8000, scoped, tag = 'input window, operand 0']
    #allocation5 [shape = 's32[2]{0}', space=sflag, size = 0x8, scoped, tag = 'scoped memory for tpu_custom_call.1']
    #allocation6 [shape = 's32[2]{0}', space=sflag, size = 0x8, scoped, tag = 'scoped memory for tpu_custom_call.1']
    #allocation7 [shape = 'u8[4096]{0}', space=vmem, size = 0x1000, scoped, tag = 'input window, operand 1, single buffered']
    #allocation8 [shape = 's32[1]{0}', space=sflag, size = 0x4, scoped, tag = 'scoped memory for tpu_custom_call.1']
    #allocation9 [shape = 'u8[8192]{0}', space=vmem, size = 0x2000, scoped, tag = 'output window, operand 0']
    %7 = vsyncpa [#allocation5], 0
    %s8 = scalar_lea.sflag [#allocation5], 1
    %9 = vsyncpa %s8, 0
    %10 = vsyncpa [#allocation8], 0
    %11 = vsyncpa [#allocation6], 0
    %s12 = scalar_lea.sflag [#allocation6], 1
    %13 = vsyncpa %s12, 0
    loop: start=0, step=1, limit=4
    $region2: #{tpu_custom_call.1} parent=1 // loop_pre_header
      _
    $region3: #{tpu_custom_call.1} parent=1 // loop_header
      %s15 = sphi 0, %s19
      %p16 = scmp.ge.s32.totalorder %s15, 4
      %s25 = sphi 0, %s27
      %s28 = sphi 0, %s25
      %s29 = sphi 0, %s28
      %s45 = sphi 0, %s29
      %s49 = sphi 0, %s49
      %s51 = sphi 0, %s49
      %s52 = sphi 0, %s51
      %s66 = sphi 0, %s52
      %s72 = sphi 0, %s74
      %s75 = sphi 0, %s72
      %s76 = sphi 0, %s75
      %s92 = sphi 0, %s76
    $region4: #{tpu_custom_call.1} parent=1 // loop_header_branch
      %18 = sbr.rel (%p16) target = $region8
    $region5: #{tpu_custom_call.1} parent=1 // loop_body
      %s20 = ssub.s32 %s15, 1
      %s21 = ssub.s32 %s15, 2
      %s22 = sadd.s32 %s15, 1
      %s23 = ssub.s32 %s15, %s22
      %p24 = scmp.eq.s32.totalorder %s23, 0
      %s26 = sadd.s32 %s25, 1
      %s27 = scalar_select %p24, %s25, %s26
      %p30 = pneg %p24
      %p31 = scmp.eq.s32.totalorder %s15, 1
      %p32 = por %p30, %p31
      %p33 = scmp.ne.s32.totalorder %s25, %s28
      %p34 = scmp.eq.s32.totalorder %s15, 0
      %p35 = por %p33, %p34
      %p36 = scmp.ne.s32.totalorder %s25, %s28
      %p37 = scmp.eq.s32.totalorder %s20, 1
      %p38 = por %p36, %p37
      %p39 = scmp.ne.s32.totalorder %s28, %s29
      %p40 = scmp.eq.s32.totalorder %s20, 0
      %p41 = por %p39, %p40
      %p42 = scmp.ne.s32.totalorder %s28, %s29
      %p43 = scmp.eq.s32.totalorder %s21, 1
      %p44 = por %p42, %p43
      %p46 = scmp.ne.s32.totalorder %s29, %s45
      %p47 = scmp.eq.s32.totalorder %s21, 0
      %p48 = por %p46, %p47
      %s50 = sadd.s32 %s49, 1
      %p53 = scmp.eq.s32.totalorder %s15, 1
      %p54 = scmp.ne.s32.totalorder %s49, %s51
      %p55 = scmp.eq.s32.totalorder %s15, 0
      %p56 = por %p54, %p55
      %p57 = scmp.ne.s32.totalorder %s49, %s51
      %p58 = scmp.eq.s32.totalorder %s20, 1
      %p59 = por %p57, %p58
      %p60 = scmp.ne.s32.totalorder %s51, %s52
      %p61 = scmp.eq.s32.totalorder %s20, 0
      %p62 = por %p60, %p61
      %p63 = scmp.ne.s32.totalorder %s51, %s52
      %p64 = scmp.eq.s32.totalorder %s21, 1
      %p65 = por %p63, %p64
      %p67 = scmp.ne.s32.totalorder %s52, %s66
      %p68 = scmp.eq.s32.totalorder %s21, 0
      %p69 = por %p67, %p68
      %s70 = ssub.s32 %s15, %s22
      %p71 = scmp.eq.s32.totalorder %s70, 0
      %s73 = sadd.s32 %s72, 1
      %s74 = scalar_select %p71, %s72, %s73
      %p77 = pneg %p71
      %p78 = scmp.eq.s32.totalorder %s15, 1
      %p79 = por %p77, %p78
      %p80 = scmp.ne.s32.totalorder %s72, %s75
      %p81 = scmp.eq.s32.totalorder %s15, 0
      %p82 = por %p80, %p81
      %p83 = scmp.ne.s32.totalorder %s72, %s75
      %p84 = scmp.eq.s32.totalorder %s20, 1
      %p85 = por %p83, %p84
      %p86 = scmp.ne.s32.totalorder %s75, %s76
      %p87 = scmp.eq.s32.totalorder %s20, 0
      %p88 = por %p86, %p87
      %p89 = scmp.ne.s32.totalorder %s75, %s76
      %p90 = scmp.eq.s32.totalorder %s21, 1
      %p91 = por %p89, %p90
      %p93 = scmp.ne.s32.totalorder %s76, %s92
      %p94 = scmp.eq.s32.totalorder %s21, 0
      %p95 = por %p93, %p94
      %p96 = scmp.le.s32.totalorder 1, %s15
      %p97 = scmp.lt.s32.totalorder %s15, 3
      %p98 = pnand %p96, %p97
      %p99 = pneg %p98
      // Predicated region
      $region9: #{tpu_custom_call.1} parent=5 // pred_check
        _
      $region10: #{tpu_custom_call.1} parent=5 // pred_check_branch
        %101 = sbr.rel (%p98) target = $region12
      $region11: #{tpu_custom_call.1} parent=5 // pred_region
        %s102 = ssub.s32 %s15, 1
        // Predicated region
        $region13: #{tpu_custom_call.1} parent=11 // pred_check
          %p103 = pneg %p62
        $region14: #{tpu_custom_call.1} parent=11 // pred_check_branch
          %105 = sbr.rel (%p103) target = $region16
        $region15: #{tpu_custom_call.1} parent=11 // pred_region
          %s107 = ssub.s32 128, 128
          %108 = vsyncadd [#allocation8], %s107
          %s110 = sshll.u32 [#allocation7], 4
          %s111 = int_to_ptr.vmem [resolvable:$true] %s110
          %113 = dma.hbm_to_vmem [thread:$0]  %s1, 128, %s111, [#allocation8]
        $region16: #{tpu_custom_call.1} parent=11 // pred_fallthru
          _
      $region12: #{tpu_custom_call.1} parent=5 // pred_fallthru
        _
      %p114 = scmp.lt.s32.totalorder %s15, 2
      // Predicated region
      $region17: #{tpu_custom_call.1} parent=5 // pred_check
        %p115 = pneg %p114
      $region18: #{tpu_custom_call.1} parent=5 // pred_check_branch
        %117 = sbr.rel (%p115) target = $region20
      $region19: #{tpu_custom_call.1} parent=5 // pred_region
        // Predicated region
        $region21: #{tpu_custom_call.1} parent=19 // pred_check
          %p118 = pneg %p35
        $region22: #{tpu_custom_call.1} parent=19 // pred_check_branch
          %120 = sbr.rel (%p118) target = $region24
        $region23: #{tpu_custom_call.1} parent=19 // pred_region
          %s121 = sand.u32 %s25, 1
          %s122 = scalar_lea.sflag [#allocation5], %s121
          %s123 = sand.u32 %s25, 1
          %s124 = smul.addr %s123, 32
          %s125 = scalar_lea.vmem [#allocation4], %s124
          %s127 = ssub.s32 512, 512
          %128 = vsyncadd %s122, %s127
          %s129 = smul.addr %s15, 4
          %s130 = smul.addr %s129, 128
          %s131 = scalar_lea.hbm %s0, %s130
          %s132 = sshll.u32 %s125, 4
          %s133 = int_to_ptr.vmem [resolvable:$true] %s132
          %138 = dma.hbm_to_vmem [thread:$0]  %s131, 512, %s133, %s122, 128, 128, 8
        $region24: #{tpu_custom_call.1} parent=19 // pred_fallthru
          _
      $region20: #{tpu_custom_call.1} parent=5 // pred_fallthru
        _
      %p139 = scmp.le.s32.totalorder 1, %s15
      %p140 = scmp.lt.s32.totalorder %s15, 3
      %p141 = pnand %p139, %p140
      %p142 = pneg %p141
      // Predicated region
      $region25: #{tpu_custom_call.1} parent=5 // pred_check
        _
      $region26: #{tpu_custom_call.1} parent=5 // pred_check_branch
        %144 = sbr.rel (%p141) target = $region28
      $region27: #{tpu_custom_call.1} parent=5 // pred_region
        %s145 = ssub.s32 %s15, 1
        %s146 = sand.u32 %s28, 1
        %s147 = scalar_lea.sflag [#allocation5], %s146
        %s148 = sand.u32 %s28, 1
        %s149 = smul.addr %s148, 32
        %s150 = scalar_lea.vmem [#allocation4], %s149
        // Predicated region
        $region29: #{tpu_custom_call.1} parent=27 // pred_check
          %p151 = pneg %p41
        $region30: #{tpu_custom_call.1} parent=27 // pred_check_branch
          %153 = sbr.rel (%p151) target = $region32
        $region31: #{tpu_custom_call.1} parent=27 // pred_region
          %154 = dma.done %s147, 512
        $region32: #{tpu_custom_call.1} parent=27 // pred_fallthru
          _
        // Predicated region
        $region33: #{tpu_custom_call.1} parent=27 // pred_check
          %p155 = pneg %p62
        $region34: #{tpu_custom_call.1} parent=27 // pred_check_branch
          %157 = sbr.rel (%p155) target = $region36
        $region35: #{tpu_custom_call.1} parent=27 // pred_region
          %158 = dma.done [#allocation8], 128
        $region36: #{tpu_custom_call.1} parent=27 // pred_fallthru
          _
        %s159 = sand.u32 %s28, 1
        %s160 = scalar_lea.sflag [#allocation5], %s159
        %s161 = sand.u32 %s28, 1
        %s162 = smul.addr %s161, 32
        %s163 = scalar_lea.vmem [#allocation4], %s162
        %p164 = pneg %p41
        %p165 = pneg %p38
        %p166 = pneg %p62
        %p167 = pneg %p59
        %p168 = pneg %p88
        %p169 = pneg %p85
        %s170 = sand.u32 %s75, 1
        %s171 = scalar_lea.sflag [#allocation6], %s170
        %s172 = sand.u32 %s75, 1
        %s173 = smul.addr %s172, 8
        %s174 = scalar_lea.vmem [#allocation9], %s173
        %vm175 = vcmask 23552
        %176 = vst.msk [vmem:[#allocation2] sm:$0xff] %vm175, 0.0
        %177 = vst.msk [vmem:[#allocation2 + $0x8] sm:$0xff] %vm175, 0.0
        %178 = vst.msk [vmem:[#allocation2 + $0x10] sm:$0xff] %vm175, 0.0
        %179 = vst.msk [vmem:[#allocation2 + $0x18] sm:$0xff] %vm175, 0.0
        %vm180 = vcmask 179352
        %181 = vst.msk [vmem:[#allocation2] sm:$0xff] %vm180, 0.0
        %182 = vst.msk [vmem:[#allocation2 + $0x8] sm:$0xff] %vm180, 0.0
        %183 = vst.msk [vmem:[#allocation2 + $0x10] sm:$0xff] %vm180, 0.0
        %184 = vst.msk [vmem:[#allocation2 + $0x18] sm:$0xff] %vm180, 0.0
        %v185 = vld [vmem:[%s150] sm:$0xff]
        %v186 = vld [vmem:[%s150 + $0x8] sm:$0xff]
        %v187 = vld [vmem:[%s150 + $0x10] sm:$0xff]
        %v188 = vld [vmem:[%s150 + $0x18] sm:$0xff]
        %193 = vrot.lane.b32.xlu0 %v185, 3
        %v194 = vpop.permute.xlu0 %193
        %195 = vrot.lane.b32.xlu0 %v186, 3
        %v196 = vpop.permute.xlu0 %195
        %197 = vrot.lane.b32.xlu0 %v187, 3
        %v198 = vpop.permute.xlu0 %197
        %199 = vrot.lane.b32.xlu0 %v188, 3
        %v200 = vpop.permute.xlu0 %199
        %vm205 = vcmask 154648
        %206 = vst.msk [vmem:[#allocation2] sm:$0xff] %vm205, %v194
        %207 = vst.msk [vmem:[#allocation2 + $0x8] sm:$0xff] %vm205, %v196
        %208 = vst.msk [vmem:[#allocation2 + $0x10] sm:$0xff] %vm205, %v198
        %209 = vst.msk [vmem:[#allocation2 + $0x18] sm:$0xff] %vm205, %v200
        %v210 = vld [vmem:[#allocation2] sm:$0xff]
        %v211 = vld [vmem:[#allocation2 + $0x8] sm:$0xff]
        %v212 = vld [vmem:[#allocation2 + $0x10] sm:$0xff]
        %v213 = vld [vmem:[#allocation2 + $0x18] sm:$0xff]
        %v214 = vcombine.low %v210, %v212
        %v215 = vcombine.high %v210, %v212
        %v217 = vunpack.c.l.s4 1983009808
        %v218 = vunpack.c.0.s8 %v217
        %v219 = vlaneseq
        %v220 = vshrl.u32 %v219, 7
        %v221 = vsub.s32 %v218, %v220
        %v222 = vrot.slane %v214, %v221
        %v224 = vunpack.c.l.s4 1983009808
        %v225 = vunpack.c.0.s8 %v224
        %v226 = vlaneseq
        %v227 = vshrl.u32 %v226, 7
        %v228 = vsub.s32 %v225, %v227
        %v229 = vrot.slane %v215, %v228
        %v230 = vcombine.low %v211, %v213
        %v231 = vcombine.high %v211, %v213
        %v233 = vunpack.c.l.s4 1983009808
        %v234 = vunpack.c.0.s8 %v233
        %v235 = vlaneseq
        %v236 = vshrl.u32 %v235, 7
        %v237 = vsub.s32 %v234, %v236
        %v238 = vrot.slane %v230, %v237
        %v240 = vunpack.c.l.s4 1983009808
        %v241 = vunpack.c.0.s8 %v240
        %v242 = vlaneseq
        %v243 = vshrl.u32 %v242, 7
        %v244 = vsub.s32 %v241, %v243
        %v245 = vrot.slane %v231, %v244
        %v246 = vcombine.low %v222, %v238
        %v247 = vcombine.high %v222, %v238
        %v249 = vunpack.c.l.s4 1934713408
        %v250 = vunpack.c.0.s8 %v249
        %v251 = vlaneseq
        %v252 = vshrl.u32 %v251, 7
        %v253 = vsub.s32 %v250, %v252
        %v254 = vrot.slane %v246, %v253
        %v256 = vunpack.c.l.s4 1934713408
        %v257 = vunpack.c.0.s8 %v256
        %v258 = vlaneseq
        %v259 = vshrl.u32 %v258, 7
        %v260 = vsub.s32 %v257, %v259
        %v261 = vrot.slane %v247, %v260
        %v262 = vcombine.low %v229, %v245
        %v263 = vcombine.high %v229, %v245
        %v265 = vunpack.c.l.s4 1934713408
        %v266 = vunpack.c.0.s8 %v265
        %v267 = vlaneseq
        %v268 = vshrl.u32 %v267, 7
        %v269 = vsub.s32 %v266, %v268
        %v270 = vrot.slane %v262, %v269
        %v272 = vunpack.c.l.s4 1934713408
        %v273 = vunpack.c.0.s8 %v272
        %v274 = vlaneseq
        %v275 = vshrl.u32 %v274, 7
        %v276 = vsub.s32 %v273, %v275
        %v277 = vrot.slane %v263, %v276
        %v278 = vcombine.high %v254, 0.0
        %v279 = vcombine.high %v261, 0.0
        %v280 = vcombine.high %v270, 0.0
        %v281 = vcombine.high %v277, 0.0
        %283 = vrot.lane.b32.xlu0 %v278, 16
        %v284 = vpop.permute.xlu0 %283
        %287 = vrot.lane.b32.xlu0 %v261, 32
        %v288 = vpop.permute.xlu0 %287
        %291 = vrot.lane.b32.xlu0 %v279, 48
        %v292 = vpop.permute.xlu0 %291
        %295 = vrot.lane.b32.xlu0 %v270, 64
        %v296 = vpop.permute.xlu0 %295
        %299 = vrot.lane.b32.xlu0 %v280, 80
        %v300 = vpop.permute.xlu0 %299
        %303 = vrot.lane.b32.xlu0 %v277, 96
        %v304 = vpop.permute.xlu0 %303
        %307 = vrot.lane.b32.xlu0 %v281, 112
        %v308 = vpop.permute.xlu0 %307
        %vm310 = vcmask 130048
        %v311 = vsel %vm310, %v254, %v284
        %vm312 = vcmask 261120
        %v313 = vsel %vm312, %v311, %v288
        %vm314 = vcmask 392192
        %v315 = vsel %vm314, %v313, %v292
        %vm316 = vcmask 523264
        %v317 = vsel %vm316, %v315, %v296
        %vm318 = vcmask 654336
        %v319 = vsel %vm318, %v317, %v300
        %vm320 = vcmask 785408
        %v321 = vsel %vm320, %v319, %v304
        %vm322 = vcmask 916480
        %v323 = vsel %vm322, %v321, %v308
        %324 = vst [vmem:[#allocation3] sm:$0xf] %v323
        %v325 = vld [vmem:[#allocation2] sm:$0xff]
        %v326 = vld [vmem:[#allocation2 + $0x8] sm:$0xff]
        %v327 = vld [vmem:[#allocation2 + $0x10] sm:$0xff]
        %v328 = vld [vmem:[#allocation2 + $0x18] sm:$0xff]
        %333 = vrot.lane.b32.xlu0 %v325, 127
        %v334 = vpop.permute.xlu0 %333
        %335 = vrot.lane.b32.xlu0 %v326, 127
        %v336 = vpop.permute.xlu0 %335
        %337 = vrot.lane.b32.xlu0 %v327, 127
        %v338 = vpop.permute.xlu0 %337
        %339 = vrot.lane.b32.xlu0 %v328, 127
        %v340 = vpop.permute.xlu0 %339
        %v345 = vcombine.low %v334, %v338
        %v346 = vcombine.high %v334, %v338
        %v348 = vunpack.c.l.s4 1983009808
        %v349 = vunpack.c.0.s8 %v348
        %v350 = vlaneseq
        %v351 = vshrl.u32 %v350, 7
        %v352 = vsub.s32 %v349, %v351
        %v353 = vrot.slane %v345, %v352
        %v355 = vunpack.c.l.s4 1983009808
        %v356 = vunpack.c.0.s8 %v355
        %v357 = vlaneseq
        %v358 = vshrl.u32 %v357, 7
        %v359 = vsub.s32 %v356, %v358
        %v360 = vrot.slane %v346, %v359
        %v361 = vcombine.low %v336, %v340
        %v362 = vcombine.high %v336, %v340
        %v364 = vunpack.c.l.s4 1983009808
        %v365 = vunpack.c.0.s8 %v364
        %v366 = vlaneseq
        %v367 = vshrl.u32 %v366, 7
        %v368 = vsub.s32 %v365, %v367
        %v369 = vrot.slane %v361, %v368
        %v371 = vunpack.c.l.s4 1983009808
        %v372 = vunpack.c.0.s8 %v371
        %v373 = vlaneseq
        %v374 = vshrl.u32 %v373, 7
        %v375 = vsub.s32 %v372, %v374
        %v376 = vrot.slane %v362, %v375
        %v377 = vcombine.low %v353, %v369
        %v378 = vcombine.high %v353, %v369
        %v380 = vunpack.c.l.s4 1934713408
        %v381 = vunpack.c.0.s8 %v380
        %v382 = vlaneseq
        %v383 = vshrl.u32 %v382, 7
        %v384 = vsub.s32 %v381, %v383
        %v385 = vrot.slane %v377, %v384
        %v387 = vunpack.c.l.s4 1934713408
        %v388 = vunpack.c.0.s8 %v387
        %v389 = vlaneseq
        %v390 = vshrl.u32 %v389, 7
        %v391 = vsub.s32 %v388, %v390
        %v392 = vrot.slane %v378, %v391
        %v393 = vcombine.low %v360, %v376
        %v394 = vcombine.high %v360, %v376
        %v396 = vunpack.c.l.s4 1934713408
        %v397 = vunpack.c.0.s8 %v396
        %v398 = vlaneseq
        %v399 = vshrl.u32 %v398, 7
        %v400 = vsub.s32 %v397, %v399
        %v401 = vrot.slane %v393, %v400
        %v403 = vunpack.c.l.s4 1934713408
        %v404 = vunpack.c.0.s8 %v403
        %v405 = vlaneseq
        %v406 = vshrl.u32 %v405, 7
        %v407 = vsub.s32 %v404, %v406
        %v408 = vrot.slane %v394, %v407
        %v409 = vcombine.high %v385, 0.0
        %v410 = vcombine.high %v392, 0.0
        %v411 = vcombine.high %v401, 0.0
        %v412 = vcombine.high %v408, 0.0
        %414 = vrot.lane.b32.xlu0 %v409, 16
        %v415 = vpop.permute.xlu0 %414
        %418 = vrot.lane.b32.xlu0 %v392, 32
        %v419 = vpop.permute.xlu0 %418
        %422 = vrot.lane.b32.xlu0 %v410, 48
        %v423 = vpop.permute.xlu0 %422
        %426 = vrot.lane.b32.xlu0 %v401, 64
        %v427 = vpop.permute.xlu0 %426
        %430 = vrot.lane.b32.xlu0 %v411, 80
        %v431 = vpop.permute.xlu0 %430
        %434 = vrot.lane.b32.xlu0 %v408, 96
        %v435 = vpop.permute.xlu0 %434
        %438 = vrot.lane.b32.xlu0 %v412, 112
        %v439 = vpop.permute.xlu0 %438
        %v441 = vsel %vm310, %v385, %v415
        %v442 = vsel %vm312, %v441, %v419
        %v443 = vsel %vm314, %v442, %v423
        %v444 = vsel %vm316, %v443, %v427
        %v445 = vsel %vm318, %v444, %v431
        %v446 = vsel %vm320, %v445, %v435
        %v447 = vsel %vm322, %v446, %v439
        %448 = vst [vmem:[#allocation3 + $0x4] sm:$0xf] %v447
        %v449 = vld [vmem:[#allocation2] sm:$0xff]
        %v450 = vld [vmem:[#allocation2 + $0x8] sm:$0xff]
        %v451 = vld [vmem:[#allocation2 + $0x10] sm:$0xff]
        %v452 = vld [vmem:[#allocation2 + $0x18] sm:$0xff]
        %457 = vrot.lane.b32.xlu0 %v449, 126
        %v458 = vpop.permute.xlu0 %457
        %459 = vrot.lane.b32.xlu0 %v450, 126
        %v460 = vpop.permute.xlu0 %459
        %461 = vrot.lane.b32.xlu0 %v451, 126
        %v462 = vpop.permute.xlu0 %461
        %463 = vrot.lane.b32.xlu0 %v452, 126
        %v464 = vpop.permute.xlu0 %463
        %v469 = vcombine.low %v458, %v462
        %v470 = vcombine.high %v458, %v462
        %v472 = vunpack.c.l.s4 1983009808
        %v473 = vunpack.c.0.s8 %v472
        %v474 = vlaneseq
        %v475 = vshrl.u32 %v474, 7
        %v476 = vsub.s32 %v473, %v475
        %v477 = vrot.slane %v469, %v476
        %v479 = vunpack.c.l.s4 1983009808
        %v480 = vunpack.c.0.s8 %v479
        %v481 = vlaneseq
        %v482 = vshrl.u32 %v481, 7
        %v483 = vsub.s32 %v480, %v482
        %v484 = vrot.slane %v470, %v483
        %v485 = vcombine.low %v460, %v464
        %v486 = vcombine.high %v460, %v464
        %v488 = vunpack.c.l.s4 1983009808
        %v489 = vunpack.c.0.s8 %v488
        %v490 = vlaneseq
        %v491 = vshrl.u32 %v490, 7
        %v492 = vsub.s32 %v489, %v491
        %v493 = vrot.slane %v485, %v492
        %v495 = vunpack.c.l.s4 1983009808
        %v496 = vunpack.c.0.s8 %v495
        %v497 = vlaneseq
        %v498 = vshrl.u32 %v497, 7
        %v499 = vsub.s32 %v496, %v498
        %v500 = vrot.slane %v486, %v499
        %v501 = vcombine.low %v477, %v493
        %v502 = vcombine.high %v477, %v493
        %v504 = vunpack.c.l.s4 1934713408
        %v505 = vunpack.c.0.s8 %v504
        %v506 = vlaneseq
        %v507 = vshrl.u32 %v506, 7
        %v508 = vsub.s32 %v505, %v507
        %v509 = vrot.slane %v501, %v508
        %v511 = vunpack.c.l.s4 1934713408
        %v512 = vunpack.c.0.s8 %v511
        %v513 = vlaneseq
        %v514 = vshrl.u32 %v513, 7
        %v515 = vsub.s32 %v512, %v514
        %v516 = vrot.slane %v502, %v515
        %v517 = vcombine.low %v484, %v500
        %v518 = vcombine.high %v484, %v500
        %v520 = vunpack.c.l.s4 1934713408
        %v521 = vunpack.c.0.s8 %v520
        %v522 = vlaneseq
        %v523 = vshrl.u32 %v522, 7
        %v524 = vsub.s32 %v521, %v523
        %v525 = vrot.slane %v517, %v524
        %v527 = vunpack.c.l.s4 1934713408
        %v528 = vunpack.c.0.s8 %v527
        %v529 = vlaneseq
        %v530 = vshrl.u32 %v529, 7
        %v531 = vsub.s32 %v528, %v530
        %v532 = vrot.slane %v518, %v531
        %v533 = vcombine.high %v509, 0.0
        %v534 = vcombine.high %v516, 0.0
        %v535 = vcombine.high %v525, 0.0
        %v536 = vcombine.high %v532, 0.0
        %538 = vrot.lane.b32.xlu0 %v533, 16
        %v539 = vpop.permute.xlu0 %538
        %542 = vrot.lane.b32.xlu0 %v516, 32
        %v543 = vpop.permute.xlu0 %542
        %546 = vrot.lane.b32.xlu0 %v534, 48
        %v547 = vpop.permute.xlu0 %546
        %550 = vrot.lane.b32.xlu0 %v525, 64
        %v551 = vpop.permute.xlu0 %550
        %554 = vrot.lane.b32.xlu0 %v535, 80
        %v555 = vpop.permute.xlu0 %554
        %558 = vrot.lane.b32.xlu0 %v532, 96
        %v559 = vpop.permute.xlu0 %558
        %562 = vrot.lane.b32.xlu0 %v536, 112
        %v563 = vpop.permute.xlu0 %562
        %v565 = vsel %vm310, %v509, %v539
        %v566 = vsel %vm312, %v565, %v543
        %v567 = vsel %vm314, %v566, %v547
        %v568 = vsel %vm316, %v567, %v551
        %v569 = vsel %vm318, %v568, %v555
        %v570 = vsel %vm320, %v569, %v559
        %v571 = vsel %vm322, %v570, %v563
        %572 = vst [vmem:[#allocation3 + $0x8] sm:$0xf] %v571
        %v573 = vld [vmem:[#allocation2] sm:$0xff]
        %v574 = vld [vmem:[#allocation2 + $0x8] sm:$0xff]
        %v575 = vld [vmem:[#allocation2 + $0x10] sm:$0xff]
        %v576 = vld [vmem:[#allocation2 + $0x18] sm:$0xff]
        %581 = vrot.lane.b32.xlu0 %v573, 125
        %v582 = vpop.permute.xlu0 %581
        %583 = vrot.lane.b32.xlu0 %v574, 125
        %v584 = vpop.permute.xlu0 %583
        %585 = vrot.lane.b32.xlu0 %v575, 125
        %v586 = vpop.permute.xlu0 %585
        %587 = vrot.lane.b32.xlu0 %v576, 125
        %v588 = vpop.permute.xlu0 %587
        %v593 = vcombine.low %v582, %v586
        %v594 = vcombine.high %v582, %v586
        %v596 = vunpack.c.l.s4 1983009808
        %v597 = vunpack.c.0.s8 %v596
        %v598 = vlaneseq
        %v599 = vshrl.u32 %v598, 7
        %v600 = vsub.s32 %v597, %v599
        %v601 = vrot.slane %v593, %v600
        %v603 = vunpack.c.l.s4 1983009808
        %v604 = vunpack.c.0.s8 %v603
        %v605 = vlaneseq
        %v606 = vshrl.u32 %v605, 7
        %v607 = vsub.s32 %v604, %v606
        %v608 = vrot.slane %v594, %v607
        %v609 = vcombine.low %v584, %v588
        %v610 = vcombine.high %v584, %v588
        %v612 = vunpack.c.l.s4 1983009808
        %v613 = vunpack.c.0.s8 %v612
        %v614 = vlaneseq
        %v615 = vshrl.u32 %v614, 7
        %v616 = vsub.s32 %v613, %v615
        %v617 = vrot.slane %v609, %v616
        %v619 = vunpack.c.l.s4 1983009808
        %v620 = vunpack.c.0.s8 %v619
        %v621 = vlaneseq
        %v622 = vshrl.u32 %v621, 7
        %v623 = vsub.s32 %v620, %v622
        %v624 = vrot.slane %v610, %v623
        %v625 = vcombine.low %v601, %v617
        %v626 = vcombine.high %v601, %v617
        %v628 = vunpack.c.l.s4 1934713408
        %v629 = vunpack.c.0.s8 %v628
        %v630 = vlaneseq
        %v631 = vshrl.u32 %v630, 7
        %v632 = vsub.s32 %v629, %v631
        %v633 = vrot.slane %v625, %v632
        %v635 = vunpack.c.l.s4 1934713408
        %v636 = vunpack.c.0.s8 %v635
        %v637 = vlaneseq
        %v638 = vshrl.u32 %v637, 7
        %v639 = vsub.s32 %v636, %v638
        %v640 = vrot.slane %v626, %v639
        %v641 = vcombine.low %v608, %v624
        %v642 = vcombine.high %v608, %v624
        %v644 = vunpack.c.l.s4 1934713408
        %v645 = vunpack.c.0.s8 %v644
        %v646 = vlaneseq
        %v647 = vshrl.u32 %v646, 7
        %v648 = vsub.s32 %v645, %v647
        %v649 = vrot.slane %v641, %v648
        %v651 = vunpack.c.l.s4 1934713408
        %v652 = vunpack.c.0.s8 %v651
        %v653 = vlaneseq
        %v654 = vshrl.u32 %v653, 7
        %v655 = vsub.s32 %v652, %v654
        %v656 = vrot.slane %v642, %v655
        %v657 = vcombine.high %v633, 0.0
        %v658 = vcombine.high %v640, 0.0
        %v659 = vcombine.high %v649, 0.0
        %v660 = vcombine.high %v656, 0.0
        %662 = vrot.lane.b32.xlu0 %v657, 16
        %v663 = vpop.permute.xlu0 %662
        %666 = vrot.lane.b32.xlu0 %v640, 32
        %v667 = vpop.permute.xlu0 %666
        %670 = vrot.lane.b32.xlu0 %v658, 48
        %v671 = vpop.permute.xlu0 %670
        %674 = vrot.lane.b32.xlu0 %v649, 64
        %v675 = vpop.permute.xlu0 %674
        %678 = vrot.lane.b32.xlu0 %v659, 80
        %v679 = vpop.permute.xlu0 %678
        %682 = vrot.lane.b32.xlu0 %v656, 96
        %v683 = vpop.permute.xlu0 %682
        %686 = vrot.lane.b32.xlu0 %v660, 112
        %v687 = vpop.permute.xlu0 %686
        %v689 = vsel %vm310, %v633, %v663
        %v690 = vsel %vm312, %v689, %v667
        %v691 = vsel %vm314, %v690, %v671
        %v692 = vsel %vm316, %v691, %v675
        %v693 = vsel %vm318, %v692, %v679
        %v694 = vsel %vm320, %v693, %v683
        %v695 = vsel %vm322, %v694, %v687
        %696 = vst [vmem:[#allocation3 + $0xc] sm:$0xf] %v695
        %v697 = vld [vmem:[#allocation2] sm:$0xff]
        %v698 = vld [vmem:[#allocation2 + $0x8] sm:$0xff]
        %v699 = vld [vmem:[#allocation2 + $0x10] sm:$0xff]
        %v700 = vld [vmem:[#allocation2 + $0x18] sm:$0xff]
        %705 = vrot.lane.b32.xlu0 %v697, 124
        %v706 = vpop.permute.xlu0 %705
        %707 = vrot.lane.b32.xlu0 %v698, 124
        %v708 = vpop.permute.xlu0 %707
        %709 = vrot.lane.b32.xlu0 %v699, 124
        %v710 = vpop.permute.xlu0 %709
        %711 = vrot.lane.b32.xlu0 %v700, 124
        %v712 = vpop.permute.xlu0 %711
        %v717 = vcombine.low %v706, %v710
        %v718 = vcombine.high %v706, %v710
        %v720 = vunpack.c.l.s4 1983009808
        %v721 = vunpack.c.0.s8 %v720
        %v722 = vlaneseq
        %v723 = vshrl.u32 %v722, 7
        %v724 = vsub.s32 %v721, %v723
        %v725 = vrot.slane %v717, %v724
        %v727 = vunpack.c.l.s4 1983009808
        %v728 = vunpack.c.0.s8 %v727
        %v729 = vlaneseq
        %v730 = vshrl.u32 %v729, 7
        %v731 = vsub.s32 %v728, %v730
        %v732 = vrot.slane %v718, %v731
        %v733 = vcombine.low %v708, %v712
        %v734 = vcombine.high %v708, %v712
        %v736 = vunpack.c.l.s4 1983009808
        %v737 = vunpack.c.0.s8 %v736
        %v738 = vlaneseq
        %v739 = vshrl.u32 %v738, 7
        %v740 = vsub.s32 %v737, %v739
        %v741 = vrot.slane %v733, %v740
        %v743 = vunpack.c.l.s4 1983009808
        %v744 = vunpack.c.0.s8 %v743
        %v745 = vlaneseq
        %v746 = vshrl.u32 %v745, 7
        %v747 = vsub.s32 %v744, %v746
        %v748 = vrot.slane %v734, %v747
        %v749 = vcombine.low %v725, %v741
        %v750 = vcombine.high %v725, %v741
        %v752 = vunpack.c.l.s4 1934713408
        %v753 = vunpack.c.0.s8 %v752
        %v754 = vlaneseq
        %v755 = vshrl.u32 %v754, 7
        %v756 = vsub.s32 %v753, %v755
        %v757 = vrot.slane %v749, %v756
        %v759 = vunpack.c.l.s4 1934713408
        %v760 = vunpack.c.0.s8 %v759
        %v761 = vlaneseq
        %v762 = vshrl.u32 %v761, 7
        %v763 = vsub.s32 %v760, %v762
        %v764 = vrot.slane %v750, %v763
        %v765 = vcombine.low %v732, %v748
        %v766 = vcombine.high %v732, %v748
        %v768 = vunpack.c.l.s4 1934713408
        %v769 = vunpack.c.0.s8 %v768
        %v770 = vlaneseq
        %v771 = vshrl.u32 %v770, 7
        %v772 = vsub.s32 %v769, %v771
        %v773 = vrot.slane %v765, %v772
        %v775 = vunpack.c.l.s4 1934713408
        %v776 = vunpack.c.0.s8 %v775
        %v777 = vlaneseq
        %v778 = vshrl.u32 %v777, 7
        %v779 = vsub.s32 %v776, %v778
        %v780 = vrot.slane %v766, %v779
        %v781 = vcombine.high %v757, 0.0
        %v782 = vcombine.high %v764, 0.0
        %v783 = vcombine.high %v773, 0.0
        %v784 = vcombine.high %v780, 0.0
        %786 = vrot.lane.b32.xlu0 %v781, 16
        %v787 = vpop.permute.xlu0 %786
        %790 = vrot.lane.b32.xlu0 %v764, 32
        %v791 = vpop.permute.xlu0 %790
        %794 = vrot.lane.b32.xlu0 %v782, 48
        %v795 = vpop.permute.xlu0 %794
        %798 = vrot.lane.b32.xlu0 %v773, 64
        %v799 = vpop.permute.xlu0 %798
        %802 = vrot.lane.b32.xlu0 %v783, 80
        %v803 = vpop.permute.xlu0 %802
        %806 = vrot.lane.b32.xlu0 %v780, 96
        %v807 = vpop.permute.xlu0 %806
        %810 = vrot.lane.b32.xlu0 %v784, 112
        %v811 = vpop.permute.xlu0 %810
        %v813 = vsel %vm310, %v757, %v787
        %v814 = vsel %vm312, %v813, %v791
        %v815 = vsel %vm314, %v814, %v795
        %v816 = vsel %vm316, %v815, %v799
        %v817 = vsel %vm318, %v816, %v803
        %v818 = vsel %vm320, %v817, %v807
        %v819 = vsel %vm322, %v818, %v811
        %820 = vst [vmem:[#allocation3 + $0x10] sm:$0xf] %v819
        %v821 = vld [vmem:[#allocation2] sm:$0xff]
        %v822 = vld [vmem:[#allocation2 + $0x8] sm:$0xff]
        %v823 = vld [vmem:[#allocation2 + $0x10] sm:$0xff]
        %v824 = vld [vmem:[#allocation2 + $0x18] sm:$0xff]
        %829 = vrot.lane.b32.xlu0 %v821, 123
        %v830 = vpop.permute.xlu0 %829
        %831 = vrot.lane.b32.xlu0 %v822, 123
        %v832 = vpop.permute.xlu0 %831
        %833 = vrot.lane.b32.xlu0 %v823, 123
        %v834 = vpop.permute.xlu0 %833
        %835 = vrot.lane.b32.xlu0 %v824, 123
        %v836 = vpop.permute.xlu0 %835
        %v841 = vcombine.low %v830, %v834
        %v842 = vcombine.high %v830, %v834
        %v844 = vunpack.c.l.s4 1983009808
        %v845 = vunpack.c.0.s8 %v844
        %v846 = vlaneseq
        %v847 = vshrl.u32 %v846, 7
        %v848 = vsub.s32 %v845, %v847
        %v849 = vrot.slane %v841, %v848
        %v851 = vunpack.c.l.s4 1983009808
        %v852 = vunpack.c.0.s8 %v851
        %v853 = vlaneseq
        %v854 = vshrl.u32 %v853, 7
        %v855 = vsub.s32 %v852, %v854
        %v856 = vrot.slane %v842, %v855
        %v857 = vcombine.low %v832, %v836
        %v858 = vcombine.high %v832, %v836
        %v860 = vunpack.c.l.s4 1983009808
        %v861 = vunpack.c.0.s8 %v860
        %v862 = vlaneseq
        %v863 = vshrl.u32 %v862, 7
        %v864 = vsub.s32 %v861, %v863
        %v865 = vrot.slane %v857, %v864
        %v867 = vunpack.c.l.s4 1983009808
        %v868 = vunpack.c.0.s8 %v867
        %v869 = vlaneseq
        %v870 = vshrl.u32 %v869, 7
        %v871 = vsub.s32 %v868, %v870
        %v872 = vrot.slane %v858, %v871
        %v873 = vcombine.low %v849, %v865
        %v874 = vcombine.high %v849, %v865
        %v876 = vunpack.c.l.s4 1934713408
        %v877 = vunpack.c.0.s8 %v876
        %v878 = vlaneseq
        %v879 = vshrl.u32 %v878, 7
        %v880 = vsub.s32 %v877, %v879
        %v881 = vrot.slane %v873, %v880
        %v883 = vunpack.c.l.s4 1934713408
        %v884 = vunpack.c.0.s8 %v883
        %v885 = vlaneseq
        %v886 = vshrl.u32 %v885, 7
        %v887 = vsub.s32 %v884, %v886
        %v888 = vrot.slane %v874, %v887
        %v889 = vcombine.low %v856, %v872
        %v890 = vcombine.high %v856, %v872
        %v892 = vunpack.c.l.s4 1934713408
        %v893 = vunpack.c.0.s8 %v892
        %v894 = vlaneseq
        %v895 = vshrl.u32 %v894, 7
        %v896 = vsub.s32 %v893, %v895
        %v897 = vrot.slane %v889, %v896
        %v899 = vunpack.c.l.s4 1934713408
        %v900 = vunpack.c.0.s8 %v899
        %v901 = vlaneseq
        %v902 = vshrl.u32 %v901, 7
        %v903 = vsub.s32 %v900, %v902
        %v904 = vrot.slane %v890, %v903
        %v905 = vcombine.high %v881, 0.0
        %v906 = vcombine.high %v888, 0.0
        %v907 = vcombine.high %v897, 0.0
        %v908 = vcombine.high %v904, 0.0
        %910 = vrot.lane.b32.xlu0 %v905, 16
        %v911 = vpop.permute.xlu0 %910
        %914 = vrot.lane.b32.xlu0 %v888, 32
        %v915 = vpop.permute.xlu0 %914
        %918 = vrot.lane.b32.xlu0 %v906, 48
        %v919 = vpop.permute.xlu0 %918
        %922 = vrot.lane.b32.xlu0 %v897, 64
        %v923 = vpop.permute.xlu0 %922
        %926 = vrot.lane.b32.xlu0 %v907, 80
        %v927 = vpop.permute.xlu0 %926
        %930 = vrot.lane.b32.xlu0 %v904, 96
        %v931 = vpop.permute.xlu0 %930
        %934 = vrot.lane.b32.xlu0 %v908, 112
        %v935 = vpop.permute.xlu0 %934
        %v937 = vsel %vm310, %v881, %v911
        %v938 = vsel %vm312, %v937, %v915
        %v939 = vsel %vm314, %v938, %v919
        %v940 = vsel %vm316, %v939, %v923
        %v941 = vsel %vm318, %v940, %v927
        %v942 = vsel %vm320, %v941, %v931
        %v943 = vsel %vm322, %v942, %v935
        %944 = vst [vmem:[#allocation3 + $0x14] sm:$0xf] %v943
        %v945 = vld [vmem:[#allocation2] sm:$0xff]
        %v946 = vld [vmem:[#allocation2 + $0x8] sm:$0xff]
        %v947 = vld [vmem:[#allocation2 + $0x10] sm:$0xff]
        %v948 = vld [vmem:[#allocation2 + $0x18] sm:$0xff]
        %953 = vrot.lane.b32.xlu0 %v945, 122
        %v954 = vpop.permute.xlu0 %953
        %955 = vrot.lane.b32.xlu0 %v946, 122
        %v956 = vpop.permute.xlu0 %955
        %957 = vrot.lane.b32.xlu0 %v947, 122
        %v958 = vpop.permute.xlu0 %957
        %959 = vrot.lane.b32.xlu0 %v948, 122
        %v960 = vpop.permute.xlu0 %959
        %v965 = vcombine.low %v954, %v958
        %v966 = vcombine.high %v954, %v958
        %v968 = vunpack.c.l.s4 1983009808
        %v969 = vunpack.c.0.s8 %v968
        %v970 = vlaneseq
        %v971 = vshrl.u32 %v970, 7
        %v972 = vsub.s32 %v969, %v971
        %v973 = vrot.slane %v965, %v972
        %v975 = vunpack.c.l.s4 1983009808
        %v976 = vunpack.c.0.s8 %v975
        %v977 = vlaneseq
        %v978 = vshrl.u32 %v977, 7
        %v979 = vsub.s32 %v976, %v978
        %v980 = vrot.slane %v966, %v979
        %v981 = vcombine.low %v956, %v960
        %v982 = vcombine.high %v956, %v960
        %v984 = vunpack.c.l.s4 1983009808
        %v985 = vunpack.c.0.s8 %v984
        %v986 = vlaneseq
        %v987 = vshrl.u32 %v986, 7
        %v988 = vsub.s32 %v985, %v987
        %v989 = vrot.slane %v981, %v988
        %v991 = vunpack.c.l.s4 1983009808
        %v992 = vunpack.c.0.s8 %v991
        %v993 = vlaneseq
        %v994 = vshrl.u32 %v993, 7
        %v995 = vsub.s32 %v992, %v994
        %v996 = vrot.slane %v982, %v995
        %v997 = vcombine.low %v973, %v989
        %v998 = vcombine.high %v973, %v989
        %v1000 = vunpack.c.l.s4 1934713408
        %v1001 = vunpack.c.0.s8 %v1000
        %v1002 = vlaneseq
        %v1003 = vshrl.u32 %v1002, 7
        %v1004 = vsub.s32 %v1001, %v1003
        %v1005 = vrot.slane %v997, %v1004
        %v1007 = vunpack.c.l.s4 1934713408
        %v1008 = vunpack.c.0.s8 %v1007
        %v1009 = vlaneseq
        %v1010 = vshrl.u32 %v1009, 7
        %v1011 = vsub.s32 %v1008, %v1010
        %v1012 = vrot.slane %v998, %v1011
        %v1013 = vcombine.low %v980, %v996
        %v1014 = vcombine.high %v980, %v996
        %v1016 = vunpack.c.l.s4 1934713408
        %v1017 = vunpack.c.0.s8 %v1016
        %v1018 = vlaneseq
        %v1019 = vshrl.u32 %v1018, 7
        %v1020 = vsub.s32 %v1017, %v1019
        %v1021 = vrot.slane %v1013, %v1020
        %v1023 = vunpack.c.l.s4 1934713408
        %v1024 = vunpack.c.0.s8 %v1023
        %v1025 = vlaneseq
        %v1026 = vshrl.u32 %v1025, 7
        %v1027 = vsub.s32 %v1024, %v1026
        %v1028 = vrot.slane %v1014, %v1027
        %v1029 = vcombine.high %v1005, 0.0
        %v1030 = vcombine.high %v1012, 0.0
        %v1031 = vcombine.high %v1021, 0.0
        %v1032 = vcombine.high %v1028, 0.0
        %1034 = vrot.lane.b32.xlu0 %v1029, 16
        %v1035 = vpop.permute.xlu0 %1034
        %1038 = vrot.lane.b32.xlu0 %v1012, 32
        %v1039 = vpop.permute.xlu0 %1038
        %1042 = vrot.lane.b32.xlu0 %v1030, 48
        %v1043 = vpop.permute.xlu0 %1042
        %1046 = vrot.lane.b32.xlu0 %v1021, 64
        %v1047 = vpop.permute.xlu0 %1046
        %1050 = vrot.lane.b32.xlu0 %v1031, 80
        %v1051 = vpop.permute.xlu0 %1050
        %1054 = vrot.lane.b32.xlu0 %v1028, 96
        %v1055 = vpop.permute.xlu0 %1054
        %1058 = vrot.lane.b32.xlu0 %v1032, 112
        %v1059 = vpop.permute.xlu0 %1058
        %v1061 = vsel %vm310, %v1005, %v1035
        %v1062 = vsel %vm312, %v1061, %v1039
        %v1063 = vsel %vm314, %v1062, %v1043
        %v1064 = vsel %vm316, %v1063, %v1047
        %v1065 = vsel %vm318, %v1064, %v1051
        %v1066 = vsel %vm320, %v1065, %v1055
        %v1067 = vsel %vm322, %v1066, %v1059
        %1068 = vst [vmem:[#allocation3 + $0x18] sm:$0xf] %v1067
        %v1069 = vld [vmem:[#allocation7] sm:$0xff]
        %v1070 = vld [vmem:[#allocation3] sm:$0xff]
        %v1071 = vld [vmem:[#allocation3 + $0x8] sm:$0xff]
        %v1072 = vld [vmem:[#allocation3 + $0x10] sm:$0xff]
        %v1073 = vld [vmem:[#allocation3 + $0x18] sm:$0xf]
        %vm1074 = vcmask 228352
        %v1076 = vsel %vm1074, %v1069, 0
        %vm1078 = vcmask 1043456
        %v1080 = vsel %vm1078, %v1073, 0
        %1082 = vmatprep.subr.mxu0 0.0
        %1083 = vmatpush1.msra.mxu0 0.0
        %1084 = vmatprep.subr.mxu0 0.0
        %1085 = vmatpush1.msra.mxu0 0.0
        %1086 = vmatprep.subr.mxu0 0.0
        %1087 = vmatpush1.msra.mxu0 0.0
        %1088 = vmatprep.subr.mxu0 0.0
        %1089 = vmatpush1.msra.mxu0 0.0
        %1090 = vmatprep.subr.mxu0 0.0
        %1091 = vmatpush1.msra.mxu0 0.0
        %1092 = vmatprep.subr.mxu0 0.0
        %1093 = vmatpush1.msra.mxu0 0.0
        %1094 = vmatprep.subr.mxu0 0.0
        %1095 = vmatpush1.msra.mxu0 0.0
        %1096 = vmatprep.subr.mxu0 0.0
        %1097 = vmatpush1.msra.mxu0 0.0
        %1098 = vmatprep.subr.mxu0 0.0
        %1099 = vmatpush1.msra.mxu0 0.0
        %1100 = vmatprep.subr.mxu0 0.0
        %1101 = vmatpush1.msra.mxu0 0.0
        %1102 = vmatprep.subr.mxu0 0.0
        %1103 = vmatpush1.msra.mxu0 0.0
        %1104 = vmatprep.subr.mxu0 0.0
        %1105 = vmatpush1.msra.mxu0 0.0
        %1106 = vmatprep.subr.mxu0 0.0
        %1107 = vmatpush1.msra.mxu0 %v1080
        %1108 = vmatprep.subr.mxu0 0.0
        %1109 = vmatpush1.msra.mxu0 %v1072
        %1110 = vmatprep.subr.mxu0 0.0
        %1111 = vmatpush1.msra.mxu0 %v1071
        %1112 = vmatprep.subr.mxu0 0.0
        %1113 = vmatpush1.msra.mxu0 %v1070
        %1114 = vmatprep.subr.mxu0 0.0
        %1115 = vmatpush2.msra.mxu0 0.0
        %1116 = vmatprep.subr.mxu0 0.0
        %1117 = vmatpush2.msra.mxu0 0.0
        %1118 = vmatprep.subr.mxu0 0.0
        %1119 = vmatpush2.msra.mxu0 0.0
        %1120 = vmatprep.subr.mxu0 0.0
        %1121 = vmatpush2.msra.mxu0 0.0
        %1122 = vmatprep.subr.mxu0 0.0
        %1123 = vmatpush2.msra.mxu0 0.0
        %1124 = vmatprep.subr.mxu0 0.0
        %1125 = vmatpush2.msra.mxu0 0.0
        %1126 = vmatprep.subr.mxu0 0.0
        %1127 = vmatpush2.msra.mxu0 0.0
        %1128 = vmatprep.subr.mxu0 0.0
        %1129 = vmatpush2.msra.mxu0 0.0
        %1130 = vmatprep.subr.mxu0 0.0
        %1131 = vmatpush2.msra.mxu0 0.0
        %1132 = vmatprep.subr.mxu0 0.0
        %1133 = vmatpush2.msra.mxu0 0.0
        %1134 = vmatprep.subr.mxu0 0.0
        %1135 = vmatpush2.msra.mxu0 0.0
        %1136 = vmatprep.subr.mxu0 0.0
        %1137 = vmatpush2.msra.mxu0 0.0
        %1138 = vmatprep.subr.mxu0 0.0
        %1139 = vmatpush2.msra.mxu0 0.0
        %1140 = vmatprep.subr.mxu0 0.0
        %1141 = vmatpush2.msra.mxu0 0.0
        %1142 = vmatprep.subr.mxu0 0.0
        %1143 = vmatpush2.msra.mxu0 0.0
        %1144 = vmatprep.subr.mxu0 0.0
        %1145 = vmatpush2.msra.mxu0 0.0
        %1146 = vmatprep.mubr.f32.mxu0 0.0
        %1147 = vmatmul.mubr.f32.gmra.mxu0 %v1076
        %v1148 = vpop.f32.mrf.mxu0
        %v1149 = vadd.f32 0.0, %v1148
        %v1150 = vpop.f32.mrf.mxu0
        %1151 = vdwg.mxu0
        %1152 = vst [vmem:[%s174] sm:$0xff] %v1149
        %s1153 = sand.u32 %s75, 1
        %s1154 = scalar_lea.sflag [#allocation6], %s1153
        %s1155 = sand.u32 %s75, 1
        %s1156 = smul.addr %s1155, 8
        %s1157 = scalar_lea.vmem [#allocation9], %s1156
        // Predicated region
        $region37: #{tpu_custom_call.1} parent=27 // pred_check
          %p1158 = pneg %p85
        $region38: #{tpu_custom_call.1} parent=27 // pred_check_branch
          %1160 = sbr.rel (%p1158) target = $region40
        $region39: #{tpu_custom_call.1} parent=27 // pred_region
          %s1162 = ssub.s32 128, 128
          %1163 = vsyncadd %s1154, %s1162
          %s1164 = smul.addr %s20, 128
          %s1165 = scalar_lea.hbm %s2, %s1164
          %s1167 = sshll.u32 %s1157, 4
          %s1168 = int_to_ptr.vmem [resolvable:$true] %s1167
          %1170 = dma.vmem_to_hbm [thread:$0]  %s1168, 128, %s1165, %s1154
        $region40: #{tpu_custom_call.1} parent=27 // pred_fallthru
          _
      $region28: #{tpu_custom_call.1} parent=5 // pred_fallthru
        _
      %p1171 = scmp.le.s32.totalorder 2, %s15
      // Predicated region
      $region41: #{tpu_custom_call.1} parent=5 // pred_check
        %p1172 = pneg %p1171
      $region42: #{tpu_custom_call.1} parent=5 // pred_check_branch
        %1174 = sbr.rel (%p1172) target = $region44
      $region43: #{tpu_custom_call.1} parent=5 // pred_region
        %s1175 = ssub.s32 %s15, 2
        // Predicated region
        $region45: #{tpu_custom_call.1} parent=43 // pred_check
          %p1176 = pneg %p91
        $region46: #{tpu_custom_call.1} parent=43 // pred_check_branch
          %1178 = sbr.rel (%p1176) target = $region48
        $region47: #{tpu_custom_call.1} parent=43 // pred_region
          %s1179 = sand.u32 %s76, 1
          %s1180 = scalar_lea.sflag [#allocation6], %s1179
          %s1181 = sand.u32 %s76, 1
          %s1182 = smul.addr %s1181, 8
          %s1183 = scalar_lea.vmem [#allocation9], %s1182
          %1184 = dma.done %s1180, 128
        $region48: #{tpu_custom_call.1} parent=43 // pred_fallthru
          _
      $region44: #{tpu_custom_call.1} parent=5 // pred_fallthru
        _
    $region6: #{tpu_custom_call.1} parent=1 // loop_footer
      %s19 = sadd.s32 1, %s15
    $region7: #{tpu_custom_call.1} parent=1 // loop_footer_branch
      %14 = sbr.rel target = $region3
    $region8: #{tpu_custom_call.1} parent=1 // loop_exit
      _
    %1185 = vsyncpa [#allocation5], 1
    %s1186 = scalar_lea.sflag [#allocation5], 1
    %1187 = vsyncpa %s1186, 1
    %1188 = vsyncpa [#allocation8], 1
    %1189 = vsyncpa [#allocation6], 1
    %s1190 = scalar_lea.sflag [#allocation6], 1
    %1191 = vsyncpa %s1190, 1

</llo_original>
